<compile_context>
chip_gen: v6e
topology: v6e:2x2x1
jax: 0.10.0
libtpu: 0.0.40
codegen_flags: <defaults>
</compile_context>

<pallas_src>
import functools

import jax
import jax.numpy as jnp
import numpy as np
from jax.experimental import pallas as pl
from jax.experimental.pallas import tpu as pltpu


def _round_up(v, m):
    return -(-v // m) * m


def _tpu_setup():
    """Best-effort hardware query: (vmem_capacity_bytes, num_tensorcores, is_v7)."""
    vmem_cap = 128 * 1024 * 1024
    is_v7 = False
    try:
        vmem_cap = int(pltpu.get_tpu_info().vmem_capacity_bytes)
    except Exception:
        pass
    try:
        kind = jax.devices()[0].device_kind.lower()
        if "v7" in kind:
            is_v7 = True
    except Exception:
        pass
    if vmem_cap <= 64 * 1024 * 1024:
        is_v7 = True
    num_tc = 2 if is_v7 else 1
    return vmem_cap, num_tc, is_v7


def _cconv1d_kernel_fused(x_ref, w_ref, b_ref, o_ref, *, taps):
    """v5e/v6e path: one fused MXU matmul per grid step.

    x_ref : (Cin2, Wo + taps - 1)   stacked [real; imag] channels (sublane-aligned rows)
    w_ref : (Cout2, taps*Cin2)      fused complex weights [[Wr,-Wi],[Wi,Wr]], tap-major cols
    b_ref : (Cout2, 1)              folded biases [b_r - b_i ; b_r + b_i]  (f32)
    o_ref : (Cout2, Wo)             rows = [real out ; imag out]; Wo is a multiple of 128
    """
    wo = o_ref.shape[-1]
    x = x_ref[...]
    # Stack the K shifted windows along the sublane axis -> (taps*Cin2, Wo); rows are
    # sublane-aligned so this is a pure tile copy, all +/- accumulation stays in the MXU.
    xs = jnp.concatenate([x[:, k:k + wo] for k in range(taps)], axis=0)
    y = jnp.dot(w_ref[...], xs, preferred_element_type=jnp.float32)
    o_ref[...] = (y + b_ref[...]).astype(o_ref.dtype)


def _cconv1d_kernel_acc(x_ref, w_ref, b_ref, o_ref, *, taps):
    """v7x path: K accumulating MXU dots (MRB accumulates in place), no xs materialization.

    w_ref : (taps, Cout2, Cin2)
    """
    wo = o_ref.shape[-1]
    x = x_ref[...]
    acc = jnp.dot(w_ref[0], x[:, 0:wo], preferred_element_type=jnp.float32)
    for k in range(1, taps):
        acc = acc + jnp.dot(w_ref[k], x[:, k:k + wo],
                            preferred_element_type=jnp.float32)
    o_ref[...] = (acc + b_ref[...]).astype(o_ref.dtype)


@functools.partial(jax.jit,
                   static_argnames=("kernel_size", "compute_dtype", "out_dtype"))
def complex_conv1d(x, w_r, w_i, b_r, b_i, *, kernel_size=3,
                   compute_dtype=jnp.float32, out_dtype=jnp.float32):
    """x: complex64 (N, C_in, L); weights: (C_out, C_in, K); biases: (C_out,)."""
    N, C_in, L = x.shape
    C_out, _, K = w_r.shape
    assert K == kernel_size
    left = (K - 1) // 2
    right = (K - 1) - left
    # Circular padding needs pad <= sequence length (same constraint as PyTorch).
    assert left <= L and right <= L, "circular 'same' padding requires L >= K - 1"

    Lp = L + K - 1                      # per-sequence circularly padded length

    in_itemsize = jnp.dtype(compute_dtype).itemsize
    out_itemsize = jnp.dtype(out_dtype).itemsize
    sub_in = (8 * 4) // in_itemsize                      # 8 for f32, 16 for bf16
    sub_out = max(8, (8 * 4) // out_itemsize, sub_in)
    Cin2 = _round_up(2 * C_in, sub_in)                   # sublane-aligned stacked channels
    Cout2 = _round_up(2 * C_out, sub_out)

    # ---- generation-aware VMEM budget / kernel formulation -----------------------
    vmem_cap, num_tc, is_v7 = _tpu_setup()
    use_acc = is_v7                                      # MRB on v7x -> accumulating dots
    if is_v7:
        step_budget = 40 * 1024 * 1024                   # true per-step footprint cap
        vmem_limit = 52 * 1024 * 1024                    # < 64 MiB/TC physical
    else:
        step_budget = 56 * 1024 * 1024
        vmem_limit = 96 * 1024 * 1024                    # < 128 MiB physical
    vmem_limit = max(32 * 1024 * 1024, min(vmem_limit, (vmem_cap * 7) // 8))

    def step_bytes(b_blk):
        # True per-step footprint: double-buffered input/output blocks + weights
        # + in-kernel xs stack (fused form only) + f32 accumulator working set.
        wo = _round_up(b_blk * Lp, 128)
        wb = _round_up(wo + K - 1, 128)
        in_b = 2 * Cin2 * wb * in_itemsize
        out_b = 2 * Cout2 * wo * out_itemsize
        w_b = 2 * Cout2 * K * Cin2 * in_itemsize
        xs_b = 0 if use_acc else K * Cin2 * wo * in_itemsize
        y_b = Cout2 * wo * 4
        return in_b + out_b + w_b + xs_b + y_b + (1 << 14)

    # Largest batch block that fits the budget (monotone -> binary search).
    if step_bytes(N) <= step_budget:
        b_fit = N
    else:
        b_fit, lo, hi = 1, 1, N
        while lo <= hi:
            mid = (lo + hi) // 2
            if step_bytes(mid) <= step_budget:
                b_fit, lo = mid, mid + 1
            else:
                hi = mid - 1
    B_blk = max(1, b_fit)
    # Multi-TC (v7x): keep >= 2 grid steps per TensorCore so prefetch stays live.
    # Single-TC (v5e/v6e): just take the largest tile that fits (bigger tiles win).
    if num_tc >= 2 and N >= 2 * num_tc:
        B_blk = min(B_blk, max(1, N // (2 * num_tc)))
    G = -(-N // B_blk)                                   # number of grid steps
    N_pad = G * B_blk

    Wo = _round_up(B_blk * Lp, 128)                      # lane-dense, full-vreg stores
    Wb_in = Wo + (K - 1)                                 # block halo for the K shifts

    # ---- input repack (single XLA pass, fused with the mandatory complex split) --
    xr = jnp.real(x).astype(compute_dtype)
    xi = jnp.imag(x).astype(compute_dtype)
    x2 = jnp.concatenate([xr, xi], axis=1)                               # (N, 2C_in, L)
    x2 = jnp.concatenate([x2[..., L - left:], x2, x2[..., :right]], -1)  # (N, 2C_in, Lp)
    x2 = jnp.pad(x2, ((0, N_pad - N), (0, Cin2 - 2 * C_in), (0, 0)))     # (Npad, Cin2, Lp)
    x2 = (x2.reshape(G, B_blk, Cin2, Lp)
             .transpose(0, 2, 1, 3)
             .reshape(G, Cin2, B_blk * Lp))
    x2 = jnp.pad(x2, ((0, 0), (0, 0), (0, Wb_in - B_blk * Lp)))          # (G, Cin2, Wb_in)

    # ---- fused complex weights + folded bias (zero-padded to aligned shapes) -----
    w_top = jnp.concatenate([w_r, -w_i], axis=1)             # (C_out, 2C_in, K)
    w_bot = jnp.concatenate([w_i, w_r], axis=1)              # (C_out, 2C_in, K)
    w_big = jnp.concatenate([w_top, w_bot], axis=0)          # (2C_out, 2C_in, K)
    w_big = jnp.pad(w_big, ((0, Cout2 - 2 * C_out), (0, Cin2 - 2 * C_in), (0, 0)))
    w_big = w_big.astype(compute_dtype)
    b_big = jnp.concatenate([b_r - b_i, b_r + b_i])
    b_big = jnp.pad(b_big, (0, Cout2 - 2 * C_out)).reshape(Cout2, 1).astype(jnp.float32)

    if use_acc:
        w_arg = jnp.transpose(w_big, (2, 0, 1))              # (K, Cout2, Cin2)
        w_spec = pl.BlockSpec((K, Cout2, Cin2), lambda g: (0, 0, 0))
        kernel = functools.partial(_cconv1d_kernel_acc, taps=K)
    else:
        # column order = (tap k major, [real ch | imag ch] minor) -> matches kernel stack
        w_arg = jnp.transpose(w_big, (0, 2, 1)).reshape(Cout2, K * Cin2)
        w_spec = pl.BlockSpec((Cout2, K * Cin2), lambda g: (0, 0))
        kernel = functools.partial(_cconv1d_kernel_fused, taps=K)

    # TODO(synk): for very large C*L a single batch element can exceed the per-step
    # VMEM budget; that regime needs an additional halo-tiled L grid axis.
    out = pl.pallas_call(
        kernel,
        out_shape=jax.ShapeDtypeStruct((G, Cout2, Wo), out_dtype),
        grid_spec=pltpu.PrefetchScalarGridSpec(
            num_scalar_prefetch=0,
            grid=(G,),
            in_specs=[
                pl.BlockSpec((pl.Squeezed(), Cin2, Wb_in), lambda g: (g, 0, 0)),
                w_spec,
                pl.BlockSpec((Cout2, 1), lambda g: (0, 0)),
            ],
            out_specs=pl.BlockSpec((pl.Squeezed(), Cout2, Wo), lambda g: (g, 0, 0)),
        ),
        compiler_params=pltpu.CompilerParams(
            dimension_semantics=("parallel",),
            vmem_limit_bytes=vmem_limit),
    )(x2, w_arg, b_big)

    # ---- unpack: (G, 2, C_out, B_blk, Lp)[..., :L] -> complex (N, C_out, L) -------
    out = out[:, :2 * C_out, :B_blk * Lp]
    out = out.reshape(G, 2, C_out, B_blk, Lp)[..., :L]
    out = out.transpose(1, 0, 3, 2, 4).reshape(2, N_pad, C_out, L)[:, :N]
    out = out.astype(jnp.float32)
    return jax.lax.complex(out[0], out[1]).astype(jnp.complex64)


def _reference(x, w_r, w_i, b_r, b_i, kernel_size=3):
    """Pure-JAX reference (circular 'same' cross-correlation, complex conv)."""
    N, C_in, L = x.shape
    K = kernel_size
    left = (K - 1) // 2
    right = (K - 1) - left

    def conv(xreal, w, b):
        xp = jnp.concatenate([xreal[..., L - left:], xreal, xreal[..., :right]],
                             axis=-1)
        out = jnp.zeros((N, w.shape[0], L), jnp.float32)
        for k in range(K):
            out = out + jnp.einsum('oc,ncl->nol', w[:, :, k], xp[..., k:k + L])
        return out + b[None, :, None]

    xr = jnp.real(x).astype(jnp.float32)
    xi = jnp.imag(x).astype(jnp.float32)
    real = conv(xr, w_r, b_r) - conv(xi, w_i, b_i)
    imag = conv(xi, w_r, b_r) + conv(xr, w_i, b_i)
    return (real + 1j * imag).astype(jnp.complex64)


def _run_case(key, N, C_in, C_out, L, K):
    k_xr, k_xi, k_wr, k_wi, k_br, k_bi = jax.random.split(key, 6)
    x = (jax.random.normal(k_xr, (N, C_in, L), jnp.float32)
         + 1j * jax.random.normal(k_xi, (N, C_in, L), jnp.float32)
         ).astype(jnp.complex64)
    bound = 1.0 / np.sqrt(C_in * K)
    w_r = jax.random.uniform(k_wr, (C_out, C_in, K), jnp.float32, -bound, bound)
    w_i = jax.random.uniform(k_wi, (C_out, C_in, K), jnp.float32, -bound, bound)
    b_r = jax.random.uniform(k_br, (C_out,), jnp.float32, -bound, bound)
    b_i = jax.random.uniform(k_bi, (C_out,), jnp.float32, -bound, bound)

    y = complex_conv1d(x, w_r, w_i, b_r, b_i, kernel_size=K)
    y = jax.block_until_ready(y)
    y_ref = _reference(x, w_r, w_i, b_r, b_i, kernel_size=K)
    np.testing.assert_allclose(np.asarray(y), np.asarray(y_ref),
                               rtol=1e-5, atol=1e-5)


if __name__ == "__main__":
    key = jax.random.PRNGKey(0)
    k1, k2 = jax.random.split(key)
    # aligned channel counts
    _run_case(k1, N=2, C_in=4, C_out=4, L=16, K=3)
    # awkward (padded) channel counts + larger taps
    _run_case(k2, N=3, C_in=3, C_out=5, L=12, K=5)
    print("KERNEL_OK")
</pallas_src>

<mosaic_0001>
module attributes {stable_mosaic.version = 11 : i64} {
  func.func @_cconv1d_kernel_fused(%arg0: i32, %arg1: memref<1x8x130xf32, #tpu.memory_space<vmem>>, %arg2: memref<8x24xf32, #tpu.memory_space<vmem>>, %arg3: memref<8x1xf32, #tpu.memory_space<vmem>>, %arg4: memref<1x8x128xf32, #tpu.memory_space<vmem>>) attributes {dimension_semantics = [#tpu.dimension_semantics<parallel>], iteration_bounds = array<i64: 1>, scalar_prefetch = 0 : i64, scratch_operands = 0 : i64, tpu.core_type = #tpu.core_type<tc>, window_params = [{transform_indices = @transform_0, window_bounds = array<i64: 1, 8, 130>}, {pipeline_mode = #tpu.pipeline_mode<synchronous>, transform_indices = @transform_1, window_bounds = array<i64: 8, 24>}, {pipeline_mode = #tpu.pipeline_mode<synchronous>, transform_indices = @transform_2, window_bounds = array<i64: 8, 1>}, {transform_indices = @transform_3, window_bounds = array<i64: 1, 8, 128>}]} {
    %c0 = arith.constant 0 : index
    %c0_0 = arith.constant 0 : index
    %c0_1 = arith.constant 0 : index
    %0 = vector.load %arg1[%c0, %c0_0, %c0_1] : memref<1x8x130xf32, #tpu.memory_space<vmem>>, vector<1x8x130xf32>
    %1 = vector.shape_cast %0 : vector<1x8x130xf32> to vector<8x130xf32>
    %2 = vector.extract_strided_slice %1 {offsets = [0, 0], sizes = [8, 128], strides = [1, 1]} : vector<8x130xf32> to vector<8x128xf32>
    %3 = vector.extract_strided_slice %1 {offsets = [0, 1], sizes = [8, 128], strides = [1, 1]} : vector<8x130xf32> to vector<8x128xf32>
    %4 = vector.extract_strided_slice %1 {offsets = [0, 2], sizes = [8, 128], strides = [1, 1]} : vector<8x130xf32> to vector<8x128xf32>
    %5 = tpu.concatenate %2, %3, %4 in 0 : vector<8x128xf32>, vector<8x128xf32>, vector<8x128xf32> -> vector<24x128xf32>
    %c0_2 = arith.constant 0 : index
    %c0_3 = arith.constant 0 : index
    %6 = vector.load %arg2[%c0_2, %c0_3] : memref<8x24xf32, #tpu.memory_space<vmem>>, vector<8x24xf32>
    %cst = arith.constant dense<0.000000e+00> : vector<8x128xf32>
    %7 = tpu.matmul %6, %5, %cst {dimension_numbers = #tpu.dot_dimension_numbers<[1], [0], [0], [1], [0, 0, 1, 1], [], []>} : vector<8x24xf32>, vector<24x128xf32>, vector<8x128xf32> -> vector<8x128xf32>
    %c0_4 = arith.constant 0 : index
    %c0_5 = arith.constant 0 : index
    %8 = vector.load %arg3[%c0_4, %c0_5] : memref<8x1xf32, #tpu.memory_space<vmem>>, vector<8x1xf32>
    %9 = vector.broadcast %8 : vector<8x1xf32> to vector<8x128xf32>
    %10 = arith.addf %7, %9 : vector<8x128xf32>
    %c0_6 = arith.constant 0 : index
    %c0_7 = arith.constant 0 : index
    %c0_8 = arith.constant 0 : index
    %11 = vector.load %arg4[%c0_6, %c0_7, %c0_8] : memref<1x8x128xf32, #tpu.memory_space<vmem>>, vector<1x8x128xf32>
    %12 = vector.shape_cast %11 : vector<1x8x128xf32> to vector<8x128xf32>
    %13 = vector.shape_cast %10 : vector<8x128xf32> to vector<1x8x128xf32>
    tpu.vector_store %arg4[%c0_6, %c0_7, %c0_8], %13 {strides = array<i32>} : memref<1x8x128xf32, #tpu.memory_space<vmem>>, vector<1x8x128xf32>,
    return
  }
  func.func @transform_0(%arg0: i32) -> (i32, i32, i32) {
    %c0_i32 = arith.constant 0 : i32
    %c0_i32_0 = arith.constant 0 : i32
    %c0_i32_1 = arith.constant 0 : i32
    return %arg0, %c0_i32, %c0_i32_0 : i32, i32, i32
  }
  func.func @transform_1(%arg0: i32) -> (i32, i32) {
    %c0_i32 = arith.constant 0 : i32
    %c0_i32_0 = arith.constant 0 : i32
    %c0_i32_1 = arith.constant 0 : i32
    return %c0_i32, %c0_i32_0 : i32, i32
  }
  func.func @transform_2(%arg0: i32) -> (i32, i32) {
    %c0_i32 = arith.constant 0 : i32
    %c0_i32_0 = arith.constant 0 : i32
    %c0_i32_1 = arith.constant 0 : i32
    return %c0_i32, %c0_i32_0 : i32, i32
  }
  func.func @transform_3(%arg0: i32) -> (i32, i32, i32) {
    %c0_i32 = arith.constant 0 : i32
    %c0_i32_0 = arith.constant 0 : i32
    %c0_i32_1 = arith.constant 0 : i32
    return %arg0, %c0_i32, %c0_i32_0 : i32, i32, i32
  }
}

</mosaic_0001>

<llo_original>
// kernel: custom-call.1
$region0: #{custom-call.1}
  %s0 = inlined_call_operand.hbm [shape: c64[2,4,16], index: 0, kind: input, shape index: {}]
  %s1 = inlined_call_operand.vmem [shape: f32[2,4,16], index: 1, kind: output, shape index: {}]
  %s2 = scalar_lea.hbm %s0, 128
  $region1: #{custom-call.1} parent=0
    #allocation0 [shape = 's32[1]{0}', space=sflag, size = 0x4, scoped, tag = 'scoped memory for custom-call.1']
    %3 = vsyncpa [#allocation0], 0
    %s4 = sshll.u32 %s1, 4
    %s5 = int_to_ptr.vmem [resolvable:$true] %s4
    %7 = dma.hbm_to_vmem [thread:$0]  %s2, 128, %s5, [#allocation0]
    %8 = dma.done [#allocation0], 128
    %9 = vsyncpa [#allocation0], 1

// kernel: custom-call
$region0: #{custom-call}
  %s0 = inlined_call_operand.hbm [shape: c64[2,4,16], index: 0, kind: input, shape index: {}]
  %s1 = inlined_call_operand.vmem [shape: f32[2,4,16], index: 1, kind: output, shape index: {}]
  $region1: #{custom-call} parent=0
    #allocation0 [shape = 's32[1]{0}', space=sflag, size = 0x4, scoped, tag = 'scoped memory for custom-call']
    %2 = vsyncpa [#allocation0], 0
    %s3 = sshll.u32 %s1, 4
    %s4 = int_to_ptr.vmem [resolvable:$true] %s3
    %6 = dma.hbm_to_vmem [thread:$0]  %s0, 128, %s4, [#allocation0]
    %7 = dma.done [#allocation0], 128
    %8 = vsyncpa [#allocation0], 1

// kernel: neg.1
$region0: #{neg.1}
  #allocation0 [shape = 's32[1]{0}', space=sflag, size = 0x4, scoped, tag = 'scoped memory for neg.1']
  %s0 = inlined_call_operand.vmem [shape: f32[4,4,3], index: 0, kind: input, shape index: {}]
  %s1 = inlined_call_operand.vmem [shape: f32[4,4,3], index: 1, kind: output, shape index: {}]
  %v2 = vld [vmem:[%s0] sm:$0xf]
  %3 = xla_tuple %v2
  %4 = xla_tuple %3
  %v5 = vxor.u32 %v2, 2147483648
  %6 = xla_tuple %v5
  %7 = vst [vmem:[%s1] sm:$0xf] %v5
  %s8 = scalar_lea.vmem %s0, 4
  %v9 = vld [vmem:[%s8] sm:$0xf]
  %10 = xla_tuple %v9
  %11 = xla_tuple %10
  %v12 = vxor.u32 %v9, 2147483648
  %13 = xla_tuple %v12
  %s14 = scalar_lea.vmem %s1, 4
  %15 = vst [vmem:[%s14] sm:$0xf] %v12
  %s16 = scalar_lea.vmem %s0, 8
  %v17 = vld [vmem:[%s16] sm:$0xf]
  %18 = xla_tuple %v17
  %19 = xla_tuple %18
  %v20 = vxor.u32 %v17, 2147483648
  %21 = xla_tuple %v20
  %s22 = scalar_lea.vmem %s1, 8
  %23 = vst [vmem:[%s22] sm:$0xf] %v20

// kernel: custom-call.2
$region0: #{custom-call.2}
  %s0 = inlined_call_operand.vmem [shape: f32[2,4,16], index: 0, kind: input, shape index: {}]
  %s1 = inlined_call_operand.vmem [shape: f32[2,4,16], index: 1, kind: input, shape index: {}]
  %s2 = inlined_call_operand.hbm [shape: c64[2,4,16], index: 2, kind: output, shape index: {}]
  %s3 = scalar_lea.hbm %s2, 128
  $region1: #{custom-call.2} parent=0
    #allocation0 [shape = 's32[1]{0}', space=sflag, size = 0x4, scoped, tag = 'scoped memory for custom-call.2']
    %4 = vsyncpa [#allocation0], 0
    %s5 = sshll.u32 %s0, 4
    %s6 = int_to_ptr.vmem [resolvable:$true] %s5
    %8 = dma.vmem_to_hbm [thread:$0]  %s6, 128, %s2, [#allocation0]
    %9 = dma.done [#allocation0], 128
    %10 = vsyncpa [#allocation0], 1
  $region2: #{custom-call.2} parent=0
    #allocation1 [shape = 's32[1]{0}', space=sflag, size = 0x4, scoped, tag = 'scoped memory for custom-call.2']
    %11 = vsyncpa [#allocation1], 0
    %s12 = sshll.u32 %s1, 4
    %s13 = int_to_ptr.vmem [resolvable:$true] %s12
    %15 = dma.vmem_to_hbm [thread:$0]  %s13, 128, %s3, [#allocation1]
    %16 = dma.done [#allocation1], 128
    %17 = vsyncpa [#allocation1], 1

// kernel: complex_conv1d.1
$region0: #{complex_conv1d.1}
  #allocation0 [shape = 'u32[]', space=smem, size = 0x4, offset = 0x4, fixed_abs, tag = 'smem constant byte address 0x4 - core index']
  #allocation1 [shape = 'u32[144,128]{1,0:T(1,128)}', space=vmem, size = 0x12000, scoped, tag = 'internal scratch']
  %s0 = inlined_call_operand.vmem [shape: f32[1,8,130], index: 0, kind: input, shape index: {}]
  %s1 = inlined_call_operand.vmem [shape: f32[8,24], index: 1, kind: input, shape index: {}]
  %s2 = inlined_call_operand.vmem [shape: f32[8,1], index: 2, kind: input, shape index: {}]
  %s3 = inlined_call_operand.vmem [shape: f32[1,8,128], index: 3, kind: output, shape index: {}]
  %s4 = sld [smem:[#allocation0]]
  $region22: #{complex_conv1d.1} parent=0
    _
  %s6 = ssub.s32 1, %s4
  %s7 = scalar_select 0, %s6, %s4
  // Predicated region
  $region2: #{complex_conv1d.1} parent=0 // pred_check
    _
  $region3: #{complex_conv1d.1} parent=0 // pred_check_branch
    %9 = sbr.rel (0) target = $region5
  $region4: #{complex_conv1d.1} parent=0 // pred_region
    _
  $region5: #{complex_conv1d.1} parent=0 // pred_fallthru
    _
  // Predicated region
  $region6: #{complex_conv1d.1} parent=0 // pred_check
    _
  $region7: #{complex_conv1d.1} parent=0 // pred_check_branch
    %11 = sbr.rel (0) target = $region9
  $region8: #{complex_conv1d.1} parent=0 // pred_region
    _
  $region9: #{complex_conv1d.1} parent=0 // pred_fallthru
    _
  // Predicated region
  $region10: #{complex_conv1d.1} parent=0 // pred_check
    _
  $region11: #{complex_conv1d.1} parent=0 // pred_check_branch
    %13 = sbr.rel (0) target = $region13
  $region12: #{complex_conv1d.1} parent=0 // pred_region
    _
  $region13: #{complex_conv1d.1} parent=0 // pred_fallthru
    _
  %v14 = vld [vmem:[%s0] sm:$0xff]
  %v15 = vld [vmem:[%s0 + $0x8] sm:$0xff]
  %18 = vrot.lane.b32.xlu0 %v14, 127
  %v19 = vpop.permute.xlu0 %18
  %20 = vrot.lane.b32.xlu0 %v15, 127
  %v21 = vpop.permute.xlu0 %20
  %vm22 = vcmask 1039360
  %v23 = vsel %vm22, %v19, %v21
  %25 = vrot.lane.b32.xlu0 %v14, 126
  %v26 = vpop.permute.xlu0 %25
  %27 = vrot.lane.b32.xlu0 %v15, 126
  %v28 = vpop.permute.xlu0 %27
  %vm29 = vcmask 1031168
  %v30 = vsel %vm29, %v26, %v28
  %v32 = vld [vmem:[%s1] sm:$0xff]
  %v33 = vld [vmem:[%s2] sm:$0xff]
  %35 = vset.pattern.permute.xlu0 0
  %36 = vperm.xlu0 %35, %v33
  %v37 = vpop.permute.xlu0 %36
  %vm39 = vcmask 195584
  %v41 = vsel %vm39, %v32, 0
  %43 = vmatprep.subr.mxu0 0.0
  %44 = vmatpush1.msra.mxu0 0.0
  %45 = vmatprep.subr.mxu0 0.0
  %46 = vmatpush1.msra.mxu0 0.0
  %47 = vmatprep.subr.mxu0 0.0
  %48 = vmatpush1.msra.mxu0 0.0
  %49 = vmatprep.subr.mxu0 0.0
  %50 = vmatpush1.msra.mxu0 0.0
  %51 = vmatprep.subr.mxu0 0.0
  %52 = vmatpush1.msra.mxu0 0.0
  %53 = vmatprep.subr.mxu0 0.0
  %54 = vmatpush1.msra.mxu0 0.0
  %55 = vmatprep.subr.mxu0 0.0
  %56 = vmatpush1.msra.mxu0 0.0
  %57 = vmatprep.subr.mxu0 0.0
  %58 = vmatpush1.msra.mxu0 0.0
  %59 = vmatprep.subr.mxu0 0.0
  %60 = vmatpush1.msra.mxu0 0.0
  %61 = vmatprep.subr.mxu0 0.0
  %62 = vmatpush1.msra.mxu0 0.0
  %63 = vmatprep.subr.mxu0 0.0
  %64 = vmatpush1.msra.mxu0 0.0
  %65 = vmatprep.subr.mxu0 0.0
  %66 = vmatpush1.msra.mxu0 0.0
  %67 = vmatprep.subr.mxu0 0.0
  %68 = vmatpush1.msra.mxu0 0.0
  %69 = vmatprep.subr.mxu0 0.0
  %70 = vmatpush1.msra.mxu0 %v30
  %71 = vmatprep.subr.mxu0 0.0
  %72 = vmatpush1.msra.mxu0 %v23
  %73 = vmatprep.subr.mxu0 0.0
  %74 = vmatpush1.msra.mxu0 %v14
  %75 = vmatprep.subr.mxu0 0.0
  %76 = vmatpush2.msra.mxu0 0.0
  %77 = vmatprep.subr.mxu0 0.0
  %78 = vmatpush2.msra.mxu0 0.0
  %79 = vmatprep.subr.mxu0 0.0
  %80 = vmatpush2.msra.mxu0 0.0
  %81 = vmatprep.subr.mxu0 0.0
  %82 = vmatpush2.msra.mxu0 0.0
  %83 = vmatprep.subr.mxu0 0.0
  %84 = vmatpush2.msra.mxu0 0.0
  %85 = vmatprep.subr.mxu0 0.0
  %86 = vmatpush2.msra.mxu0 0.0
  %87 = vmatprep.subr.mxu0 0.0
  %88 = vmatpush2.msra.mxu0 0.0
  %89 = vmatprep.subr.mxu0 0.0
  %90 = vmatpush2.msra.mxu0 0.0
  %91 = vmatprep.subr.mxu0 0.0
  %92 = vmatpush2.msra.mxu0 0.0
  %93 = vmatprep.subr.mxu0 0.0
  %94 = vmatpush2.msra.mxu0 0.0
  %95 = vmatprep.subr.mxu0 0.0
  %96 = vmatpush2.msra.mxu0 0.0
  %97 = vmatprep.subr.mxu0 0.0
  %98 = vmatpush2.msra.mxu0 0.0
  %99 = vmatprep.subr.mxu0 0.0
  %100 = vmatpush2.msra.mxu0 0.0
  %101 = vmatprep.subr.mxu0 0.0
  %102 = vmatpush2.msra.mxu0 0.0
  %103 = vmatprep.subr.mxu0 0.0
  %104 = vmatpush2.msra.mxu0 0.0
  %105 = vmatprep.subr.mxu0 0.0
  %106 = vmatpush2.msra.mxu0 0.0
  %107 = vmatprep.mubr.f32.mxu0 0.0
  %108 = vmatmul.mubr.f32.gmra.mxu0 %v41
  %v109 = vpop.f32.mrf.mxu0
  %v110 = vadd.f32 %v37, %v109
  %v111 = vpop.f32.mrf.mxu0
  %112 = vdwg.mxu0
  %113 = vst [vmem:[%s3] sm:$0xff] %v110
  // Predicated region
  $region14: #{complex_conv1d.1} parent=0 // pred_check
    _
  $region15: #{complex_conv1d.1} parent=0 // pred_check_branch
    %115 = sbr.rel (0) target = $region17
  $region16: #{complex_conv1d.1} parent=0 // pred_region
    _
  $region17: #{complex_conv1d.1} parent=0 // pred_fallthru
    _
  // Predicated region
  $region18: #{complex_conv1d.1} parent=0 // pred_check
    _
  $region19: #{complex_conv1d.1} parent=0 // pred_check_branch
    %117 = sbr.rel (0) target = $region21
  $region20: #{complex_conv1d.1} parent=0 // pred_region
    _
  $region21: #{complex_conv1d.1} parent=0 // pred_fallthru
    _

</llo_original>
